<compile_context>
chip_gen: v7x
topology: tpu7x:2x2x1
jax: 0.10.0
libtpu: 0.0.40
codegen_flags: <defaults>
</compile_context>

<pallas_src>
from typing import NamedTuple

import jax
import jax.numpy as jnp
from jax.experimental import pallas as pl
from jax.experimental.pallas import tpu as pltpu


LANE = 128
SUBLANE = 8


def _round_up(x, m):
    return (x + m - 1) // m * m


def _default_tile_v():
    """Generation-aware streaming tile (vocab axis), multiple of 128."""
    try:
        kind = jax.devices()[0].device_kind.lower()
    except Exception:
        return 2048
    if "v7" in kind:
        return 8192   # 4 MiB f32 W tile, ~8-9 MiB double-buffered (<32 MiB scoped)
    if "v6" in kind:
        return 4096   # 2 MiB f32 W tile
    return 2048       # v5e: stay modest under the 16 MiB default scoped VMEM


class SkipGramParams(NamedTuple):
    w1t: jax.Array    # [v_pad, e_pad]  == pad(W1.T)   (input_to_hidden weight)
    w2t: jax.Array    # [e_pad, v_pad]  == pad(W2.T)   (hidden_to_output weight)
    vocab: int
    emb: int
    v_pad: int
    e_pad: int
    tile_v: int
    n_split: int      # megacore split of kernel-1's contraction axis


def prepare_skipgram_params(w1, w2, *, tile_v=None, weight_dtype=None):
    """One-time layout work: pad, transpose and (optionally) cast the weights.

    w1: [emb, vocab]   (nn.Linear(vocab -> emb).weight layout)
    w2: [vocab, emb]   (nn.Linear(emb -> vocab).weight layout)
    """
    emb, vocab = w1.shape
    assert w2.shape == (vocab, emb)

    if tile_v is None:
        tile_v = _default_tile_v()
    tile_v = max(LANE, _round_up(int(tile_v), LANE))

    e_pad = _round_up(emb, LANE)
    v128 = _round_up(vocab, LANE)
    tile_v = min(tile_v, v128)
    v_pad = _round_up(v128, tile_v)          # pad vocab to a tile multiple (exact)
    nk = v_pad // tile_v
    n_split = 2 if nk % 2 == 0 else 1        # split contraction across cores when even

    wdt = w1.dtype if weight_dtype is None else weight_dtype
    w1t = jnp.zeros((v_pad, e_pad), wdt).at[:vocab, :emb].set(w1.T.astype(wdt))
    w2t = jnp.zeros((e_pad, v_pad), wdt).at[:emb, :vocab].set(w2.T.astype(wdt))
    return SkipGramParams(w1t, w2t, vocab, emb, v_pad, e_pad, tile_v, n_split)


# ---------------------------------------------------------------------------
# Kernel 1: hidden[c] = X[:, c-th half] @ W1T[c-th half, :]
#   grid = (n_split "parallel", k-steps "arbitrary")
#   The f32 output block is resident across the reduction axis and doubles as
#   the accumulator (no VMEM scratch needed).
# ---------------------------------------------------------------------------
def hidden_kernel(x_ref, w1t_ref, h_ref):
    @pl.when(pl.program_id(1) == 0)
    def _():
        h_ref[...] = jnp.zeros_like(h_ref)

    h_ref[...] += jnp.dot(
        x_ref[...], w1t_ref[...], preferred_element_type=jnp.float32
    )


# ---------------------------------------------------------------------------
# Kernel 2: logits = hidden @ W2T   (tiled over the output vocab axis)
# ---------------------------------------------------------------------------
def logits_kernel(h_ref, w2t_ref, out_ref):
    # Cast the tiny resident hidden to the streamed weight dtype (no-op in f32,
    # enables the bf16 MXU path when weights are streamed in bf16).
    h = h_ref[...].astype(w2t_ref.dtype)
    out_ref[...] = jnp.dot(
        h, w2t_ref[...], preferred_element_type=jnp.float32
    ).astype(out_ref.dtype)


def skipgram_forward(x, params: SkipGramParams):
    """Forward pass of SkipGram: (x @ W1.T) @ W2.T, with padded/pretransposed weights."""
    batch, vocab = x.shape
    assert vocab == params.vocab
    v_pad, e_pad = params.v_pad, params.e_pad
    tv, n_split = params.tile_v, params.n_split
    b_pad = _round_up(batch, SUBLANE)

    wdt = params.w1t.dtype
    x_p = jnp.zeros((b_pad, v_pad), wdt).at[:batch, :vocab].set(x.astype(wdt))

    nk = v_pad // tv
    nk_split = nk // n_split

    # --- kernel 1: per-split partial hidden ----------------------------------
    hidden_parts = pl.pallas_call(
        hidden_kernel,
        out_shape=jax.ShapeDtypeStruct((n_split, b_pad, e_pad), jnp.float32),
        grid_spec=pltpu.PrefetchScalarGridSpec(
            num_scalar_prefetch=0,
            grid=(n_split, nk_split),
            in_specs=[
                pl.BlockSpec((b_pad, tv), lambda c, k: (0, c * nk_split + k)),
                pl.BlockSpec((tv, e_pad), lambda c, k: (c * nk_split + k, 0)),
            ],
            out_specs=pl.BlockSpec((None, b_pad, e_pad), lambda c, k: (c, 0, 0)),
        ),
        compiler_params=pltpu.CompilerParams(
            dimension_semantics=("parallel", "arbitrary")
        ),
    )(x_p, params.w1t)

    # Tiny [n_split, b_pad, 128] f32 reduction — essentially free.
    hidden = hidden_parts.sum(axis=0) if n_split > 1 else hidden_parts[0]

    # --- kernel 2: logits = hidden @ W2T --------------------------------------
    out_p = pl.pallas_call(
        logits_kernel,
        out_shape=jax.ShapeDtypeStruct((b_pad, v_pad), x.dtype),
        grid_spec=pltpu.PrefetchScalarGridSpec(
            num_scalar_prefetch=0,
            grid=(v_pad // tv,),
            in_specs=[
                pl.BlockSpec((b_pad, e_pad), lambda j: (0, 0)),
                pl.BlockSpec((e_pad, tv), lambda j: (0, j)),
            ],
            out_specs=pl.BlockSpec((b_pad, tv), lambda j: (0, j)),
        ),
        compiler_params=pltpu.CompilerParams(
            dimension_semantics=("parallel",)
        ),
    )(hidden, params.w2t)

    return out_p[:batch, :vocab]


if __name__ == "__main__":
    # ------------------------------------------------------------------ test 1
    # The module's own shapes: 10-word vocab, emb=8, one-hot contexts.
    sentences = [
        "Amy is a teacher",
        "Priska is a Boss",
        "Cindy is a Boss",
        "Bob is a Student",
        "Jack is a Student",
    ]
    vocab_size = len(set(" ".join(sentences).split()))   # 10
    embedding_size = 8
    batch = 5

    key = jax.random.PRNGKey(0)
    k_x, k_w1, k_w2, k_x2, k_w3, k_w4 = jax.random.split(key, 6)

    idx = jax.random.randint(k_x, (batch,), 0, vocab_size)
    x = jax.nn.one_hot(idx, vocab_size, dtype=jnp.float32)
    w1 = jax.random.uniform(
        k_w1, (embedding_size, vocab_size), jnp.float32,
        minval=-1.0 / jnp.sqrt(vocab_size), maxval=1.0 / jnp.sqrt(vocab_size))
    w2 = jax.random.uniform(
        k_w2, (vocab_size, embedding_size), jnp.float32,
        minval=-1.0 / jnp.sqrt(embedding_size), maxval=1.0 / jnp.sqrt(embedding_size))

    params = prepare_skipgram_params(w1, w2)          # hoisted: done once
    out = jax.block_until_ready(skipgram_forward(x, params))
    ref = (x @ w1.T) @ w2.T
    assert out.shape == (batch, vocab_size)
    assert jnp.allclose(out, ref, atol=1e-5, rtol=1e-5)

    # ------------------------------------------------------------------ test 2
    # Multi-tile path: force several grid steps and the 2-way contraction split.
    V2, E2, B2 = 500, 40, 5
    x2 = jax.random.normal(k_x2, (B2, V2), jnp.float32)
    w1b = jax.random.uniform(k_w3, (E2, V2), jnp.float32,
                             minval=-1.0 / jnp.sqrt(V2), maxval=1.0 / jnp.sqrt(V2))
    w2b = jax.random.uniform(k_w4, (V2, E2), jnp.float32,
                             minval=-1.0 / jnp.sqrt(E2), maxval=1.0 / jnp.sqrt(E2))

    params2 = prepare_skipgram_params(w1b, w2b, tile_v=128)   # v_pad=512, 4 k-steps, split=2
    out2 = jax.block_until_ready(skipgram_forward(x2, params2))
    ref2 = (x2 @ w1b.T) @ w2b.T
    assert jnp.allclose(out2, ref2, atol=1e-4, rtol=1e-4)

    # ------------------------------------------------------------------ test 3
    # bf16 weight streaming (halves HBM traffic); f32 accumulation, loose check.
    params3 = prepare_skipgram_params(w1b, w2b, tile_v=128,
                                      weight_dtype=jnp.bfloat16)
    out3 = jax.block_until_ready(skipgram_forward(x2, params3))
    assert jnp.allclose(out3, ref2, atol=5e-2, rtol=5e-2)

    print("KERNEL_OK")
</pallas_src>

<mosaic_0001>
module attributes {stable_mosaic.version = 11 : i64} {
  func.func @hidden_kernel(%arg0: i32, %arg1: i32, %arg2: memref<8x128xf32, #tpu.memory_space<vmem>>, %arg3: memref<128x128xf32, #tpu.memory_space<vmem>>, %arg4: memref<1x8x128xf32, #tpu.memory_space<vmem>>) attributes {dimension_semantics = [#tpu.dimension_semantics<parallel>, #tpu.dimension_semantics<arbitrary>], iteration_bounds = array<i64: 1, 1>, scalar_prefetch = 0 : i64, scratch_operands = 0 : i64, tpu.core_type = #tpu.core_type<tc>, window_params = [{transform_indices = @transform_0, window_bounds = array<i64: 8, 128>}, {transform_indices = @transform_1, window_bounds = array<i64: 128, 128>}, {transform_indices = @transform_2, window_bounds = array<i64: 1, 8, 128>}]} {
    %c0_i32 = arith.constant 0 : i32
    %0 = arith.cmpi eq, %arg1, %c0_i32 : i32
    %1 = arith.extui %0 : i1 to i32
    %c0_i32_0 = arith.constant 0 : i32
    %2 = arith.cmpi ne, %1, %c0_i32_0 : i32
    scf.if %2 {
      %cst_10 = arith.constant 0.000000e+00 : f32
      %12 = vector.broadcast %cst_10 : f32 to vector<8x128xf32>
      %c0_11 = arith.constant 0 : index
      %c0_12 = arith.constant 0 : index
      %c0_13 = arith.constant 0 : index
      %13 = vector.load %arg4[%c0_11, %c0_12, %c0_13] : memref<1x8x128xf32, #tpu.memory_space<vmem>>, vector<1x8x128xf32>
      %14 = vector.shape_cast %13 : vector<1x8x128xf32> to vector<8x128xf32>
      %15 = vector.shape_cast %12 : vector<8x128xf32> to vector<1x8x128xf32>
      tpu.vector_store %arg4[%c0_11, %c0_12, %c0_13], %15 {strides = array<i32>} : memref<1x8x128xf32, #tpu.memory_space<vmem>>, vector<1x8x128xf32>,
    } else {
    }
    %c0 = arith.constant 0 : index
    %c0_1 = arith.constant 0 : index
    %c0_2 = arith.constant 0 : index
    %3 = vector.load %arg4[%c0, %c0_1, %c0_2] : memref<1x8x128xf32, #tpu.memory_space<vmem>>, vector<1x8x128xf32>
    %4 = vector.shape_cast %3 : vector<1x8x128xf32> to vector<8x128xf32>
    %c0_3 = arith.constant 0 : index
    %c0_4 = arith.constant 0 : index
    %5 = vector.load %arg2[%c0_3, %c0_4] : memref<8x128xf32, #tpu.memory_space<vmem>>, vector<8x128xf32>
    %c0_5 = arith.constant 0 : index
    %c0_6 = arith.constant 0 : index
    %6 = vector.load %arg3[%c0_5, %c0_6] : memref<128x128xf32, #tpu.memory_space<vmem>>, vector<128x128xf32>
    %cst = arith.constant dense<0.000000e+00> : vector<8x128xf32>
    %7 = tpu.matmul %5, %6, %cst {dimension_numbers = #tpu.dot_dimension_numbers<[1], [0], [0], [1], [0, 0, 1, 1], [], []>} : vector<8x128xf32>, vector<128x128xf32>, vector<8x128xf32> -> vector<8x128xf32>
    %8 = arith.addf %4, %7 : vector<8x128xf32>
    %c0_7 = arith.constant 0 : index
    %c0_8 = arith.constant 0 : index
    %c0_9 = arith.constant 0 : index
    %9 = vector.load %arg4[%c0_7, %c0_8, %c0_9] : memref<1x8x128xf32, #tpu.memory_space<vmem>>, vector<1x8x128xf32>
    %10 = vector.shape_cast %9 : vector<1x8x128xf32> to vector<8x128xf32>
    %11 = vector.shape_cast %8 : vector<8x128xf32> to vector<1x8x128xf32>
    tpu.vector_store %arg4[%c0_7, %c0_8, %c0_9], %11 {strides = array<i32>} : memref<1x8x128xf32, #tpu.memory_space<vmem>>, vector<1x8x128xf32>,
    return
  }
  func.func @transform_0(%arg0: i32, %arg1: i32) -> (i32, i32) {
    %c1_i32 = arith.constant 1 : i32
    %0 = arith.muli %arg0, %c1_i32 : i32
    %1 = arith.addi %0, %arg1 : i32
    %c0_i32 = arith.constant 0 : i32
    %c0_i32_0 = arith.constant 0 : i32
    return %c0_i32, %1 : i32, i32
  }
  func.func @transform_1(%arg0: i32, %arg1: i32) -> (i32, i32) {
    %c1_i32 = arith.constant 1 : i32
    %0 = arith.muli %arg0, %c1_i32 : i32
    %1 = arith.addi %0, %arg1 : i32
    %c0_i32 = arith.constant 0 : i32
    %c0_i32_0 = arith.constant 0 : i32
    return %1, %c0_i32 : i32, i32
  }
  func.func @transform_2(%arg0: i32, %arg1: i32) -> (i32, i32, i32) {
    %c0_i32 = arith.constant 0 : i32
    %c0_i32_0 = arith.constant 0 : i32
    %c0_i32_1 = arith.constant 0 : i32
    return %arg0, %c0_i32, %c0_i32_0 : i32, i32, i32
  }
}

</mosaic_0001>

<llo_original>
// kernel: tpu_custom_call.1
$region0: #{tpu_custom_call.1}
  #allocation0 [shape = 'u32[]', space=smem, size = 0x4, offset = 0x4, fixed_abs, tag = 'smem constant byte address 0x4 - core index']
  #allocation1 [shape = 'u32[144,128]{1,0:T(1,128)}', space=vmem, size = 0x12000, scoped, tag = 'internal scratch']
  %s0 = inlined_call_operand.hbm [shape: f32[8,128], index: 0, kind: input, shape index: {}]
  %s1 = inlined_call_operand.hbm [shape: f32[128,128], index: 1, kind: input, shape index: {}]
  %s2 = inlined_call_operand.hbm [shape: f32[1,8,128], index: 2, kind: output, shape index: {}]
  %s3 = sld [smem:[#allocation0]]
  $region30: #{tpu_custom_call.1} parent=0
    _
  %s5 = ssub.s32 1, %s3
  %s6 = scalar_select 0, %s5, %s3
  $region1: #{tpu_custom_call.1} parent=0
    #allocation2 [shape = 'u8[4096]{0}', space=vmem, size = 0x1000, scoped, tag = 'input window, operand 0, single buffered']
    #allocation3 [shape = 's32[1]{0}', space=sflag, size = 0x4, scoped, tag = 'scoped memory for tpu_custom_call.1']
    #allocation4 [shape = 's32[1]{0}', space=sflag, size = 0x4, scoped, tag = 'scoped memory for tpu_custom_call.1']
    #allocation5 [shape = 'u8[65536]{0}', space=vmem, size = 0x10000, scoped, tag = 'input window, operand 1, single buffered']
    #allocation6 [shape = 's32[1]{0}', space=sflag, size = 0x4, scoped, tag = 'scoped memory for tpu_custom_call.1']
    #allocation7 [shape = 'u8[4096]{0}', space=vmem, size = 0x1000, scoped, tag = 'output window, operand 0, single buffered']
    %7 = vsyncpa [#allocation3], 0
    %8 = vsyncpa [#allocation6], 0
    %9 = vsyncpa [#allocation4], 0
    // Predicated region
    $region2: #{tpu_custom_call.1} parent=1 // pred_check
      _
    $region3: #{tpu_custom_call.1} parent=1 // pred_check_branch
      %11 = sbr.rel (0) target = $region5
    $region4: #{tpu_custom_call.1} parent=1 // pred_region
      %s12 = sadd.s32 0, 0
      %s14 = ssub.s32 128, 128
      %15 = vsyncadd [#allocation3], %s14
      %s16 = smul.addr %s12, 128
      %s17 = scalar_lea.hbm %s0, %s16
      %s19 = sshll.u32 [#allocation2], 4
      %s20 = int_to_ptr.vmem [resolvable:$true] %s19
      %22 = dma.hbm_to_vmem [thread:$0]  %s17, 128, %s20, [#allocation3]
    $region5: #{tpu_custom_call.1} parent=1 // pred_fallthru
      _
    // Predicated region
    $region6: #{tpu_custom_call.1} parent=1 // pred_check
      _
    $region7: #{tpu_custom_call.1} parent=1 // pred_check_branch
      %24 = sbr.rel (0) target = $region9
    $region8: #{tpu_custom_call.1} parent=1 // pred_region
      %s25 = sadd.s32 0, 0
      %s26 = smul.u32 16, %s25
      %s28 = ssub.s32 2048, 2048
      %29 = vsyncadd [#allocation6], %s28
      %s30 = smul.addr %s26, 128
      %s31 = scalar_lea.hbm %s1, %s30
      %s32 = sshll.u32 [#allocation5], 4
      %s33 = int_to_ptr.vmem [resolvable:$true] %s32
      %38 = dma.hbm_to_vmem [thread:$0]  %s31, 2048, %s33, [#allocation6], 128, 128, 8
    $region9: #{tpu_custom_call.1} parent=1 // pred_fallthru
      _
    // Predicated region
    $region10: #{tpu_custom_call.1} parent=1 // pred_check
      _
    $region11: #{tpu_custom_call.1} parent=1 // pred_check_branch
      %40 = sbr.rel (0) target = $region13
    $region12: #{tpu_custom_call.1} parent=1 // pred_region
      %41 = dma.done [#allocation3], 128
    $region13: #{tpu_custom_call.1} parent=1 // pred_fallthru
      _
    // Predicated region
    $region14: #{tpu_custom_call.1} parent=1 // pred_check
      _
    $region15: #{tpu_custom_call.1} parent=1 // pred_check_branch
      %43 = sbr.rel (0) target = $region17
    $region16: #{tpu_custom_call.1} parent=1 // pred_region
      %44 = dma.done [#allocation6], 2048
    $region17: #{tpu_custom_call.1} parent=1 // pred_fallthru
      _
    %s45 = sadd.s32 0, 0
    %s46 = sadd.s32 0, 0
    %s47 = smul.u32 16, %s46
    %p48 = scmp.eq.s32.totalorder 0, 0
    // Predicated region
    $region18: #{tpu_custom_call.1} parent=1 // pred_check
      %p49 = pneg %p48
    $region19: #{tpu_custom_call.1} parent=1 // pred_check_branch
      %51 = sbr.rel (%p49) target = $region21
    $region20: #{tpu_custom_call.1} parent=1 // pred_region
      %52 = vst [vmem:[#allocation7] sm:$0xff] 0.0
    $region21: #{tpu_custom_call.1} parent=1 // pred_fallthru
      _
    %v53 = vld [vmem:[#allocation7] sm:$0xff]
    %v54 = vld [vmem:[#allocation2] sm:$0xff]
    %v55 = vld [vmem:[#allocation5] sm:$0xff]
    %v56 = vld [vmem:[#allocation5 + $0x8] sm:$0xff]
    %v57 = vld [vmem:[#allocation5 + $0x10] sm:$0xff]
    %v58 = vld [vmem:[#allocation5 + $0x18] sm:$0xff]
    %v59 = vld [vmem:[#allocation5 + $0x20] sm:$0xff]
    %v60 = vld [vmem:[#allocation5 + $0x28] sm:$0xff]
    %v61 = vld [vmem:[#allocation5 + $0x30] sm:$0xff]
    %v62 = vld [vmem:[#allocation5 + $0x38] sm:$0xff]
    %v63 = vld [vmem:[#allocation5 + $0x40] sm:$0xff]
    %v64 = vld [vmem:[#allocation5 + $0x48] sm:$0xff]
    %v65 = vld [vmem:[#allocation5 + $0x50] sm:$0xff]
    %v66 = vld [vmem:[#allocation5 + $0x58] sm:$0xff]
    %v67 = vld [vmem:[#allocation5 + $0x60] sm:$0xff]
    %v68 = vld [vmem:[#allocation5 + $0x68] sm:$0xff]
    %v69 = vld [vmem:[#allocation5 + $0x70] sm:$0xff]
    %v70 = vld [vmem:[#allocation5 + $0x78] sm:$0xff]
    %71 = vmatprep.subr.mxu0 0.0
    %72 = vmatpush1.msra.mxu0 %v55
    %73 = vmatprep.subr.mxu0 0.0
    %74 = vmatpush1.msra.mxu0 %v56
    %75 = vmatprep.subr.mxu0 0.0
    %76 = vmatpush1.msra.mxu0 %v57
    %77 = vmatprep.subr.mxu0 0.0
    %78 = vmatpush1.msra.mxu0 %v58
    %79 = vmatprep.subr.mxu0 0.0
    %80 = vmatpush1.msra.mxu0 %v59
    %81 = vmatprep.subr.mxu0 0.0
    %82 = vmatpush1.msra.mxu0 %v60
    %83 = vmatprep.subr.mxu0 0.0
    %84 = vmatpush1.msra.mxu0 %v61
    %85 = vmatprep.subr.mxu0 0.0
    %86 = vmatpush1.msra.mxu0 %v62
    %87 = vmatprep.subr.mxu0 0.0
    %88 = vmatpush1.msra.mxu0 %v63
    %89 = vmatprep.subr.mxu0 0.0
    %90 = vmatpush1.msra.mxu0 %v64
    %91 = vmatprep.subr.mxu0 0.0
    %92 = vmatpush1.msra.mxu0 %v65
    %93 = vmatprep.subr.mxu0 0.0
    %94 = vmatpush1.msra.mxu0 %v66
    %95 = vmatprep.subr.mxu0 0.0
    %96 = vmatpush1.msra.mxu0 %v67
    %97 = vmatprep.subr.mxu0 0.0
    %98 = vmatpush1.msra.mxu0 %v68
    %99 = vmatprep.subr.mxu0 0.0
    %100 = vmatpush1.msra.mxu0 %v69
    %101 = vmatprep.subr.mxu0 0.0
    %102 = vmatpush1.msra.mxu0 %v70
    %103 = vmatprep.subr.mxu0 0.0
    %104 = vmatpush1.msra.mxu0 0.0
    %105 = vmatprep.subr.mxu0 0.0
    %106 = vmatpush1.msra.mxu0 0.0
    %107 = vmatprep.subr.mxu0 0.0
    %108 = vmatpush1.msra.mxu0 0.0
    %109 = vmatprep.subr.mxu0 0.0
    %110 = vmatpush1.msra.mxu0 0.0
    %111 = vmatprep.subr.mxu0 0.0
    %112 = vmatpush1.msra.mxu0 0.0
    %113 = vmatprep.subr.mxu0 0.0
    %114 = vmatpush1.msra.mxu0 0.0
    %115 = vmatprep.subr.mxu0 0.0
    %116 = vmatpush1.msra.mxu0 0.0
    %117 = vmatprep.subr.mxu0 0.0
    %118 = vmatpush1.msra.mxu0 0.0
    %119 = vmatprep.subr.mxu0 0.0
    %120 = vmatpush1.msra.mxu0 0.0
    %121 = vmatprep.subr.mxu0 0.0
    %122 = vmatpush1.msra.mxu0 0.0
    %123 = vmatprep.subr.mxu0 0.0
    %124 = vmatpush1.msra.mxu0 0.0
    %125 = vmatprep.subr.mxu0 0.0
    %126 = vmatpush1.msra.mxu0 0.0
    %127 = vmatprep.subr.mxu0 0.0
    %128 = vmatpush1.msra.mxu0 0.0
    %129 = vmatprep.subr.mxu0 0.0
    %130 = vmatpush1.msra.mxu0 0.0
    %131 = vmatprep.subr.mxu0 0.0
    %132 = vmatpush1.msra.mxu0 0.0
    %133 = vmatprep.subr.mxu0 0.0
    %134 = vmatpush1.msra.mxu0 0.0
    %135 = vmatprep.mubr.f32.mxu0 0.0
    %136 = vmatmul.mubr.f32.gmra.mrb[0].mxu0 %v54
    %v137 = vpop.f32.mrb[0].mxu0
    %v138 = vadd.f32 0.0, %v137
    %v139 = vpop.f32.mrb[0].mxu0
    %140 = vdwg.mxu0
    %v141 = vadd.f32 %v53, %v138
    %142 = vst [vmem:[#allocation7] sm:$0xff] %v141
    // Predicated region
    $region22: #{tpu_custom_call.1} parent=1 // pred_check
      _
    $region23: #{tpu_custom_call.1} parent=1 // pred_check_branch
      %144 = sbr.rel (0) target = $region25
    $region24: #{tpu_custom_call.1} parent=1 // pred_region
      %s146 = ssub.s32 128, 128
      %147 = vsyncadd [#allocation4], %s146
      %s149 = sshll.u32 [#allocation7], 4
      %s150 = int_to_ptr.vmem [resolvable:$true] %s149
      %152 = dma.vmem_to_hbm [thread:$0]  %s150, 128, %s2, [#allocation4]
    $region25: #{tpu_custom_call.1} parent=1 // pred_fallthru
      _
    // Predicated region
    $region26: #{tpu_custom_call.1} parent=1 // pred_check
      _
    $region27: #{tpu_custom_call.1} parent=1 // pred_check_branch
      %154 = sbr.rel (0) target = $region29
    $region28: #{tpu_custom_call.1} parent=1 // pred_region
      %155 = dma.done [#allocation4], 128
    $region29: #{tpu_custom_call.1} parent=1 // pred_fallthru
      _
    %156 = vsyncpa [#allocation3], 1
    %157 = vsyncpa [#allocation6], 1
    %158 = vsyncpa [#allocation4], 1

</llo_original>
